<compile_context>
chip_gen: v6e
topology: v6e:2x2x1
jax: 0.10.0
libtpu: 0.0.40
codegen_flags: <defaults>
</compile_context>

<pallas_src>
import functools

import numpy as np
import jax
import jax.numpy as jnp
from jax.experimental import pallas as pl
from jax.experimental.pallas import tpu as pltpu


# ---------------------------------------------------------------------------
# PGA Cl(3,0,1) inner-product mask (analytic replacement for
# compute_inner_product_mask()): basis blades that do NOT contain e0.
# Basis ordering: [1, e0, e1, e2, e3, e01, e02, e03, e12, e13, e23,
#                  e012, e013, e023, e123, e0123]
# ---------------------------------------------------------------------------
_INNER_PRODUCT_MASK = np.array(
    [1, 0, 1, 1, 1, 0, 0, 0, 1, 1, 1, 0, 0, 0, 1, 0], dtype=np.float32
)


# ---------------------------------------------------------------------------
# Kernel: rows = flattened (batch, ..., items), lanes = flattened (channels*16).
# ---------------------------------------------------------------------------
def _equi_layer_norm_kernel(x_ref, mask_ref, o_ref, *, inv_channels, epsilon):
    x = x_ref[...].astype(jnp.float32)          # (TM, C*16)
    m = mask_ref[...].astype(jnp.float32)       # (1,  C*16)  inner-product mask, tiled C times

    # sum over (channels, masked mv components) == C * mean_c(||x_c||^2)
    sq = jnp.sum(x * x * m, axis=-1, keepdims=True)            # (TM, 1)  XLU reduce
    mean_sq = sq * inv_channels
    inv_norm = jax.lax.rsqrt(jnp.maximum(mean_sq, epsilon))     # EUP, clamp == torch.clamp(min=eps)

    o_ref[...] = (x * inv_norm).astype(o_ref.dtype)


def _choose_block_rows(n_rows, lane_width, bytes_per_elem=4, target_bytes=2 << 20):
    """Pick a row-tile: big enough to amortize per-step overhead, small enough
    that (in + out) double buffers stay well under the scoped VMEM limit."""
    if n_rows <= 8:
        return n_rows                                # single block == full dim (always legal)
    tm = target_bytes // max(1, lane_width * bytes_per_elem)
    tm = min(n_rows, max(8, tm), 1024)
    tm = max(8, (tm // 8) * 8)                       # keep sublane-dim a multiple of 8
    return tm


def equi_layer_norm(x, epsilon: float = 0.01):
    """x: (..., channels, 16) -> same shape.  channel_dim is -2 (module default)."""
    *lead, C, K = x.shape
    assert K == 16, "last dim must be the 16 PGA multivector components"
    n_rows = int(np.prod(lead)) if lead else 1
    lane_width = C * K

    # Free (row-major) reshape: no transpose, no extra HBM traffic.
    x2d = x.reshape(n_rows, lane_width)
    mask = jnp.asarray(np.tile(_INNER_PRODUCT_MASK, C)[None, :], dtype=jnp.float32)

    tm = _choose_block_rows(n_rows, lane_width, np.dtype(x.dtype).itemsize)
    grid = (pl.cdiv(n_rows, tm),)

    kernel = functools.partial(
        _equi_layer_norm_kernel, inv_channels=1.0 / float(C), epsilon=float(epsilon)
    )

    out = pl.pallas_call(
        kernel,
        out_shape=jax.ShapeDtypeStruct((n_rows, lane_width), x.dtype),
        grid=grid,
        in_specs=[
            pl.BlockSpec((tm, lane_width), lambda i: (i, 0)),   # activations tile
            pl.BlockSpec((1, lane_width), lambda i: (0, 0)),    # mask (resident, tiny)
        ],
        out_specs=pl.BlockSpec((tm, lane_width), lambda i: (i, 0)),
        compiler_params=pltpu.CompilerParams(
            dimension_semantics=("parallel",),                  # shard rows across TCs (v7x)
        ),
    )(x2d, mask)

    return out.reshape(x.shape)


if __name__ == "__main__":
    key = jax.random.PRNGKey(0)
    B, S, C = 2, 8, 4                                 # batch=2, seq=8, mv channels=4, mv dim=16
    x = jax.random.normal(key, (B, S, C, 16), dtype=jnp.float32)

    out = equi_layer_norm(x, epsilon=0.01)
    out = jax.block_until_ready(out)
    assert out.shape == x.shape

    # Pure-JAX reference mirroring the PyTorch module.
    mask_bool = _INNER_PRODUCT_MASK.astype(bool)
    sq = jnp.sum(x[..., mask_bool] ** 2, axis=-1, keepdims=True)   # (..., C, 1)
    sq = jnp.mean(sq, axis=-2, keepdims=True)                      # mean over channel dim (-2)
    sq = jnp.maximum(sq, 0.01)
    ref = x / jnp.sqrt(sq)

    np.testing.assert_allclose(np.asarray(out), np.asarray(ref), rtol=1e-4, atol=1e-5)
    print("KERNEL_OK")
</pallas_src>

<mosaic_0001>
module attributes {stable_mosaic.version = 11 : i64} {
  func.func @_equi_layer_norm_kernel(%arg0: i32, %arg1: memref<16x64xf32, #tpu.memory_space<vmem>>, %arg2: memref<1x64xf32, #tpu.memory_space<vmem>>, %arg3: memref<16x64xf32, #tpu.memory_space<vmem>>) attributes {dimension_semantics = [#tpu.dimension_semantics<parallel>], iteration_bounds = array<i64: 1>, scalar_prefetch = 0 : i64, scratch_operands = 0 : i64, tpu.core_type = #tpu.core_type<tc>, window_params = [{transform_indices = @transform_0, window_bounds = array<i64: 16, 64>}, {pipeline_mode = #tpu.pipeline_mode<synchronous>, transform_indices = @transform_1, window_bounds = array<i64: 1, 64>}, {transform_indices = @transform_2, window_bounds = array<i64: 16, 64>}]} {
    %c0 = arith.constant 0 : index
    %c0_0 = arith.constant 0 : index
    %0 = vector.load %arg1[%c0, %c0_0] : memref<16x64xf32, #tpu.memory_space<vmem>>, vector<16x64xf32>
    %c0_1 = arith.constant 0 : index
    %c0_2 = arith.constant 0 : index
    %1 = vector.load %arg2[%c0_1, %c0_2] : memref<1x64xf32, #tpu.memory_space<vmem>>, vector<1x64xf32>
    %2 = arith.mulf %0, %0 : vector<16x64xf32>
    %3 = vector.broadcast %1 : vector<1x64xf32> to vector<16x64xf32>
    %4 = arith.mulf %2, %3 : vector<16x64xf32>
    %cst = arith.constant dense<0.000000e+00> : vector<16xf32>
    %5 = vector.multi_reduction <add>, %4, %cst [1] : vector<16x64xf32> to vector<16xf32>
    %6 = vector.shape_cast %5 : vector<16xf32> to vector<16x1xf32>
    %cst_3 = arith.constant 2.500000e-01 : f32
    %7 = vector.broadcast %cst_3 : f32 to vector<16x1xf32>
    %8 = arith.mulf %6, %7 : vector<16x1xf32>
    %cst_4 = arith.constant 0.00999999977 : f32
    %9 = vector.broadcast %cst_4 : f32 to vector<16x1xf32>
    %10 = arith.maximumf %8, %9 : vector<16x1xf32>
    %11 = math.rsqrt %10 : vector<16x1xf32>
    %12 = vector.broadcast %11 : vector<16x1xf32> to vector<16x64xf32>
    %13 = arith.mulf %0, %12 : vector<16x64xf32>
    %c0_5 = arith.constant 0 : index
    %c0_6 = arith.constant 0 : index
    %14 = vector.load %arg3[%c0_5, %c0_6] : memref<16x64xf32, #tpu.memory_space<vmem>>, vector<16x64xf32>
    tpu.vector_store %arg3[%c0_5, %c0_6], %13 {strides = array<i32>} : memref<16x64xf32, #tpu.memory_space<vmem>>, vector<16x64xf32>,
    return
  }
  func.func @transform_0(%arg0: i32) -> (i32, i32) {
    %c0_i32 = arith.constant 0 : i32
    %c0_i32_0 = arith.constant 0 : i32
    return %arg0, %c0_i32 : i32, i32
  }
  func.func @transform_1(%arg0: i32) -> (i32, i32) {
    %c0_i32 = arith.constant 0 : i32
    %c0_i32_0 = arith.constant 0 : i32
    %c0_i32_1 = arith.constant 0 : i32
    return %c0_i32, %c0_i32_0 : i32, i32
  }
  func.func @transform_2(%arg0: i32) -> (i32, i32) {
    %c0_i32 = arith.constant 0 : i32
    %c0_i32_0 = arith.constant 0 : i32
    return %arg0, %c0_i32 : i32, i32
  }
}

</mosaic_0001>

<llo_original>
// kernel: tpu_custom_call.1
$region0: #{tpu_custom_call.1}
  #allocation0 [shape = 'u32[]', space=smem, size = 0x4, offset = 0x4, fixed_abs, tag = 'smem constant byte address 0x4 - core index']
  #allocation1 [shape = 'u32[144,128]{1,0:T(1,128)}', space=vmem, size = 0x12000, scoped, tag = 'internal scratch']
  %s0 = inlined_call_operand.hbm [shape: f32[16,64], index: 0, kind: input, shape index: {}]
  %s1 = inlined_call_operand.vmem [shape: f32[1,64], index: 1, kind: input, shape index: {}]
  %s2 = inlined_call_operand.hbm [shape: f32[16,64], index: 2, kind: output, shape index: {}]
  %s3 = sld [smem:[#allocation0]]
  $region22: #{tpu_custom_call.1} parent=0
    _
  %s5 = ssub.s32 1, %s3
  %s6 = scalar_select 0, %s5, %s3
  $region1: #{tpu_custom_call.1} parent=0
    #allocation2 [shape = 'u8[8192]{0}', space=vmem, size = 0x2000, scoped, tag = 'input window, operand 0, single buffered']
    #allocation3 [shape = 's32[1]{0}', space=sflag, size = 0x4, scoped, tag = 'scoped memory for tpu_custom_call.1']
    #allocation4 [shape = 's32[1]{0}', space=sflag, size = 0x4, scoped, tag = 'scoped memory for tpu_custom_call.1']
    #allocation5 [shape = 'u8[8192]{0}', space=vmem, size = 0x2000, scoped, tag = 'output window, operand 0, single buffered']
    %7 = vsyncpa [#allocation3], 0
    %8 = vsyncpa [#allocation4], 0
    // Predicated region
    $region2: #{tpu_custom_call.1} parent=1 // pred_check
      _
    $region3: #{tpu_custom_call.1} parent=1 // pred_check_branch
      %10 = sbr.rel (0) target = $region5
    $region4: #{tpu_custom_call.1} parent=1 // pred_region
      %s12 = ssub.s32 256, 256
      %13 = vsyncadd [#allocation3], %s12
      %s14 = sshll.u32 [#allocation2], 4
      %s15 = int_to_ptr.vmem [resolvable:$true] %s14
      %20 = dma.hbm_to_vmem [thread:$0]  %s0, 256, %s15, [#allocation3], 128, 128, 8
    $region5: #{tpu_custom_call.1} parent=1 // pred_fallthru
      _
    // Predicated region
    $region6: #{tpu_custom_call.1} parent=1 // pred_check
      _
    $region7: #{tpu_custom_call.1} parent=1 // pred_check_branch
      %22 = sbr.rel (0) target = $region9
    $region8: #{tpu_custom_call.1} parent=1 // pred_region
      _
    $region9: #{tpu_custom_call.1} parent=1 // pred_fallthru
      _
    // Predicated region
    $region10: #{tpu_custom_call.1} parent=1 // pred_check
      _
    $region11: #{tpu_custom_call.1} parent=1 // pred_check_branch
      %24 = sbr.rel (0) target = $region13
    $region12: #{tpu_custom_call.1} parent=1 // pred_region
      %25 = dma.done [#allocation3], 256
    $region13: #{tpu_custom_call.1} parent=1 // pred_fallthru
      _
    %v26 = vld [vmem:[#allocation2] sm:$0xff]
    %v27 = vld [vmem:[#allocation2 + $0x8] sm:$0xff]
    %v28 = vld [vmem:[%s1] sm:$0x1]
    %v29 = vmul.f32 %v26, %v26
    %v30 = vmul.f32 %v27, %v27
    %v32 = vlaneseq
    %v33 = vshrl.u32 %v32, 7
    %v34 = vsub.s32 0, %v33
    %v35 = vrot.slane %v28, %v34
    %v37 = vmul.f32 %v29, %v35
    %v38 = vmul.f32 %v30, %v35
    %vm39 = vcmask 523264
    %v40 = vsel %vm39, %v37, 0.0
    %41 = vadd.xlane.f32.xlu0 %v40
    %v42 = vpop.xlane.xlu0 %41
    %v43 = vsel %vm39, %v38, 0.0
    %44 = vadd.xlane.f32.xlu0 %v43
    %v45 = vpop.xlane.xlu0 %44
    %v46 = vmul.f32 %v42, 0.25
    %v47 = vmul.f32 %v45, 0.25
    %v48 = vmax.f32 %v46, 0.01
    %v49 = vmax.f32 %v47, 0.01
    %v50 = vrsqrt.pop %v48
    %v51 = vrsqrt.pop %v49
    %v52 = vmul.f32 %v26, %v50
    %v53 = vmul.f32 %v27, %v51
    %54 = vst.msk [vmem:[#allocation5] sm:$0xff] %vm39, %v52
    %55 = vst.msk [vmem:[#allocation5 + $0x8] sm:$0xff] %vm39, %v53
    // Predicated region
    $region14: #{tpu_custom_call.1} parent=1 // pred_check
      _
    $region15: #{tpu_custom_call.1} parent=1 // pred_check_branch
      %57 = sbr.rel (0) target = $region17
    $region16: #{tpu_custom_call.1} parent=1 // pred_region
      %s59 = ssub.s32 256, 256
      %60 = vsyncadd [#allocation4], %s59
      %s61 = sshll.u32 [#allocation5], 4
      %s62 = int_to_ptr.vmem [resolvable:$true] %s61
      %67 = dma.vmem_to_hbm [thread:$0]  %s62, 256, %s2, [#allocation4], 128, 128, 8
    $region17: #{tpu_custom_call.1} parent=1 // pred_fallthru
      _
    // Predicated region
    $region18: #{tpu_custom_call.1} parent=1 // pred_check
      _
    $region19: #{tpu_custom_call.1} parent=1 // pred_check_branch
      %69 = sbr.rel (0) target = $region21
    $region20: #{tpu_custom_call.1} parent=1 // pred_region
      %70 = dma.done [#allocation4], 256
    $region21: #{tpu_custom_call.1} parent=1 // pred_fallthru
      _
    %71 = vsyncpa [#allocation3], 1
    %72 = vsyncpa [#allocation4], 1

</llo_original>
